<compile_context>
chip_gen: v6e
topology: v6e:2x2x1
jax: 0.10.0
libtpu: 0.0.40
codegen_flags: <defaults>
</compile_context>

<pallas_src>
import jax
import jax.numpy as jnp
from jax.experimental import pallas as pl
from jax.experimental.pallas import tpu as pltpu

_LANE = 128
_SUBLANE_BYTES = 32            # one sublane packs 32 bytes (8 x f32, 16 x bf16)
_TARGET_BLOCK_BYTES = 2 << 20  # ~2 MiB x block: roofline plateau, VMEM-safe
_VMEM_SOFT_LIMIT = 12 << 20    # only pass vmem_limit_bytes past this estimate


def _round_up(a, m):
    return ((a + m - 1) // m) * m


def _cdiv(a, b):
    return (a + b - 1) // b


# ----------------------------- kernels --------------------------------------
# Masked 3D variants — blocks: x/z (1, C, tt); mask (1, 1, tt);
# scale/bias (1, C, 1) in f32 (scale = exp(logs) fwd / exp(-logs) rev).

def _fwd_mask_kernel(x_ref, mask_ref, scale_ref, bias_ref, z_ref):
    x = x_ref[...].astype(jnp.float32)
    m = mask_ref[...].astype(jnp.float32)
    z_ref[...] = ((bias_ref[...] + scale_ref[...] * x) * m).astype(z_ref.dtype)


def _rev_mask_kernel(x_ref, mask_ref, scale_ref, bias_ref, z_ref):
    x = x_ref[...].astype(jnp.float32)
    m = mask_ref[...].astype(jnp.float32)
    z_ref[...] = ((x - bias_ref[...]) * scale_ref[...] * m).astype(z_ref.dtype)


# No-mask variants — work for both the 3D (1, C, tt) and the flattened 2D
# (rt, tt) layouts (scale/bias broadcast along the last axis either way).

def _fwd_kernel(x_ref, scale_ref, bias_ref, z_ref):
    x = x_ref[...].astype(jnp.float32)
    z_ref[...] = (bias_ref[...] + scale_ref[...] * x).astype(z_ref.dtype)


def _rev_kernel(x_ref, scale_ref, bias_ref, z_ref):
    x = x_ref[...].astype(jnp.float32)
    z_ref[...] = ((x - bias_ref[...]) * scale_ref[...]).astype(z_ref.dtype)


# --------------------------- tiling helpers ----------------------------------

def _choose_tt(C, T, itemsize):
    """Lane tile for (1, C, tt) blocks targeting ~_TARGET_BLOCK_BYTES."""
    tt_cap = _round_up(T, _LANE)
    tt = (_TARGET_BLOCK_BYTES // (max(C, 1) * itemsize) // _LANE) * _LANE
    return max(_LANE, min(tt, 4096, tt_cap))


def _vmem_limit(vmem_need):
    return int(vmem_need) if vmem_need > _VMEM_SOFT_LIMIT else None


# ------------------------------ pallas paths ---------------------------------

def _actnorm_masked(x, x_mask, scale_f32, bias_f32, reverse):
    B, C, T = x.shape
    dtype = x.dtype
    itemsize = jnp.dtype(dtype).itemsize
    m_itemsize = jnp.dtype(x_mask.dtype).itemsize

    tt = _choose_tt(C, T, itemsize)
    n_t = _cdiv(T, tt)
    # v7x has 2 TensorCores: make sure there are >= 2 grid steps to shard.
    if B * n_t < 2 and T > _LANE:
        tt = max(_LANE, _round_up(_cdiv(T, 2), _LANE))
        n_t = _cdiv(T, tt)

    kernel = _rev_mask_kernel if reverse else _fwd_mask_kernel

    x_block = C * tt * itemsize
    vmem_need = 2 * (2 * x_block + tt * m_itemsize) + 4 * C * 4 + (256 << 10)

    grid_spec = pltpu.PrefetchScalarGridSpec(
        num_scalar_prefetch=0,
        grid=(B, n_t),
        in_specs=[
            pl.BlockSpec((1, C, tt), lambda b, t: (b, 0, t)),
            pl.BlockSpec((1, 1, tt), lambda b, t: (b, 0, t)),
            pl.BlockSpec((1, C, 1), lambda b, t: (0, 0, 0)),
            pl.BlockSpec((1, C, 1), lambda b, t: (0, 0, 0)),
        ],
        out_specs=pl.BlockSpec((1, C, tt), lambda b, t: (b, 0, t)),
    )
    return pl.pallas_call(
        kernel,
        out_shape=jax.ShapeDtypeStruct((B, C, T), dtype),
        grid_spec=grid_spec,
        compiler_params=pltpu.CompilerParams(
            dimension_semantics=("parallel", "parallel"),
            vmem_limit_bytes=_vmem_limit(vmem_need)),
        cost_estimate=pl.CostEstimate(
            flops=3 * B * C * T,
            transcendentals=0,
            bytes_accessed=2 * B * C * T * itemsize + B * T * m_itemsize + 2 * C * 4),
    )(x, x_mask, scale_f32, bias_f32)


def _actnorm_nomask_3d(x, scale_f32, bias_f32, reverse):
    B, C, T = x.shape
    dtype = x.dtype
    itemsize = jnp.dtype(dtype).itemsize

    tt = _choose_tt(C, T, itemsize)
    n_t = _cdiv(T, tt)
    if B * n_t < 2 and T > _LANE:
        tt = max(_LANE, _round_up(_cdiv(T, 2), _LANE))
        n_t = _cdiv(T, tt)

    kernel = _rev_kernel if reverse else _fwd_kernel
    x_block = C * tt * itemsize
    vmem_need = 4 * x_block + 4 * C * 4 + (256 << 10)

    grid_spec = pltpu.PrefetchScalarGridSpec(
        num_scalar_prefetch=0,
        grid=(B, n_t),
        in_specs=[
            pl.BlockSpec((1, C, tt), lambda b, t: (b, 0, t)),
            pl.BlockSpec((1, C, 1), lambda b, t: (0, 0, 0)),
            pl.BlockSpec((1, C, 1), lambda b, t: (0, 0, 0)),
        ],
        out_specs=pl.BlockSpec((1, C, tt), lambda b, t: (b, 0, t)),
    )
    return pl.pallas_call(
        kernel,
        out_shape=jax.ShapeDtypeStruct((B, C, T), dtype),
        grid_spec=grid_spec,
        compiler_params=pltpu.CompilerParams(
            dimension_semantics=("parallel", "parallel"),
            vmem_limit_bytes=_vmem_limit(vmem_need)),
        cost_estimate=pl.CostEstimate(
            flops=2 * B * C * T,
            transcendentals=0,
            bytes_accessed=2 * B * C * T * itemsize + 2 * C * 4),
    )(x, scale_f32, bias_f32)


def _actnorm_nomask_2d(x, scale_f32, bias_f32, reverse):
    """Small-C no-mask path: flatten to (B*C, T) for full sublane density."""
    B, C, T = x.shape
    dtype = x.dtype
    itemsize = jnp.dtype(dtype).itemsize
    R = B * C

    x2 = x.reshape(R, T)                                     # free reshape (contiguous)
    scale2 = jnp.broadcast_to(scale_f32, (B, C, 1)).reshape(R, 1)
    bias2 = jnp.broadcast_to(bias_f32, (B, C, 1)).reshape(R, 1)

    tt_cap = _round_up(T, _LANE)
    if R * _LANE * itemsize <= _TARGET_BLOCK_BYTES:
        rt = R
        tt = (_TARGET_BLOCK_BYTES // (R * itemsize) // _LANE) * _LANE
        tt = max(_LANE, min(tt, 4096, tt_cap))
    else:
        tt = min(512, tt_cap)
        rt = (_TARGET_BLOCK_BYTES // (tt * itemsize) // 8) * 8
        rt = max(8, min(rt, _round_up(R, 8)))
    n_r = _cdiv(R, rt)
    n_t = _cdiv(T, tt)
    # v7x: keep >= 2 grid steps if anything can be split.
    if n_r * n_t < 2:
        if T > _LANE:
            tt = max(_LANE, _round_up(_cdiv(T, 2), _LANE))
            n_t = _cdiv(T, tt)
        elif R >= 16:
            rt = _round_up(_cdiv(R, 2), 8)
            n_r = _cdiv(R, rt)

    kernel = _rev_kernel if reverse else _fwd_kernel
    x_block = rt * tt * itemsize
    vmem_need = 4 * x_block + 4 * rt * 4 + (256 << 10)

    grid_spec = pltpu.PrefetchScalarGridSpec(
        num_scalar_prefetch=0,
        grid=(n_r, n_t),
        in_specs=[
            pl.BlockSpec((rt, tt), lambda r, t: (r, t)),
            pl.BlockSpec((rt, 1), lambda r, t: (r, 0)),
            pl.BlockSpec((rt, 1), lambda r, t: (r, 0)),
        ],
        out_specs=pl.BlockSpec((rt, tt), lambda r, t: (r, t)),
    )
    z2 = pl.pallas_call(
        kernel,
        out_shape=jax.ShapeDtypeStruct((R, T), dtype),
        grid_spec=grid_spec,
        compiler_params=pltpu.CompilerParams(
            dimension_semantics=("parallel", "parallel"),
            vmem_limit_bytes=_vmem_limit(vmem_need)),
        cost_estimate=pl.CostEstimate(
            flops=2 * R * T,
            transcendentals=0,
            bytes_accessed=2 * R * T * itemsize + 2 * R * 4),
    )(x2, scale2, bias2)
    return z2.reshape(B, C, T)


# ------------------------------- wrapper --------------------------------------

def actnorm_forward(x, logs, bias, x_mask=None, reverse=False):
    """ActNorm forward/reverse.

    Args:
      x:      (B, C, T) activations.
      logs:   (1, C, 1) log-scale parameter.
      bias:   (1, C, 1) bias parameter.
      x_mask: optional (B, 1, T) mask (1 = valid frame).
      reverse: inverse transform if True.

    Returns:
      (z, logdet) with z: (B, C, T) and logdet: (B,) float32 (None if reverse).
    """
    B, C, T = x.shape
    itemsize = jnp.dtype(x.dtype).itemsize

    # Parameters: exp() and logdet computed outside the kernel, in f32.
    logs_f32 = logs.astype(jnp.float32)
    bias_f32 = bias.astype(jnp.float32)
    scale_f32 = jnp.exp(-logs_f32) if reverse else jnp.exp(logs_f32)

    if reverse:
        logdet = None
    else:
        if x_mask is not None:
            x_len = jnp.sum(x_mask.astype(jnp.float32), axis=(1, 2))
        else:
            x_len = jnp.full((B,), float(T), dtype=jnp.float32)
        logdet = jnp.sum(logs_f32) * x_len  # (B,) float32

    if x_mask is not None:
        z = _actnorm_masked(x, x_mask, scale_f32, bias_f32, reverse)
    elif C * itemsize < _SUBLANE_BYTES:
        # C too small to fill a sublane -> flatten rows for full density.
        z = _actnorm_nomask_2d(x, scale_f32, bias_f32, reverse)
    else:
        z = _actnorm_nomask_3d(x, scale_f32, bias_f32, reverse)
    return z, logdet


# ------------------------------- test -----------------------------------------
if __name__ == "__main__":
    key = jax.random.PRNGKey(0)
    kx, kl, kb, kx2 = jax.random.split(key, 4)

    B, C, T = 2, 4, 16
    x = jax.random.normal(kx, (B, C, T), dtype=jnp.float32)
    # Non-trivial mask: first batch fully valid, second batch half valid.
    lengths = jnp.array([T, T // 2], dtype=jnp.int32)
    x_mask = (jnp.arange(T)[None, None, :] < lengths[:, None, None]).astype(
        jnp.float32)

    # Module initializes params to zeros; small random values keep the test
    # non-trivial while remaining deterministic.
    logs = 0.1 * jax.random.normal(kl, (1, C, 1), dtype=jnp.float32)
    bias = 0.1 * jax.random.normal(kb, (1, C, 1), dtype=jnp.float32)

    # ---- forward with mask (3D masked path, ragged T tile) ----
    z, logdet = actnorm_forward(x, logs, bias, x_mask=x_mask, reverse=False)
    z = jax.block_until_ready(z)
    logdet = jax.block_until_ready(logdet)
    z_ref = (bias + jnp.exp(logs) * x) * x_mask
    logdet_ref = jnp.sum(logs) * jnp.sum(x_mask, axis=(1, 2))
    assert jnp.allclose(z, z_ref, atol=1e-5, rtol=1e-5)
    assert jnp.allclose(logdet, logdet_ref, atol=1e-5, rtol=1e-5)

    # ---- reverse with mask (logdet is None); round-trips on valid frames ----
    x_rec, ld = actnorm_forward(z, logs, bias, x_mask=x_mask, reverse=True)
    x_rec = jax.block_until_ready(x_rec)
    assert ld is None
    assert jnp.allclose(x_rec, x * x_mask, atol=1e-5, rtol=1e-5)

    # ---- forward without mask: small C -> flattened 2D sublane-dense path ----
    z2, logdet2 = actnorm_forward(x, logs, bias, x_mask=None, reverse=False)
    z2 = jax.block_until_ready(z2)
    logdet2 = jax.block_until_ready(logdet2)
    assert jnp.allclose(z2, bias + jnp.exp(logs) * x, atol=1e-5, rtol=1e-5)
    assert jnp.allclose(logdet2, jnp.sum(logs) * float(T), atol=1e-5, rtol=1e-5)

    # ---- forward without mask: C >= 8, ragged T (3D path, masked last tile) --
    B3, C3, T3 = 2, 8, 200
    x3 = jax.random.normal(kx2, (B3, C3, T3), dtype=jnp.float32)
    logs3 = 0.1 * jax.random.normal(kl, (1, C3, 1), dtype=jnp.float32)
    bias3 = 0.1 * jax.random.normal(kb, (1, C3, 1), dtype=jnp.float32)
    z3, _ = actnorm_forward(x3, logs3, bias3, x_mask=None, reverse=False)
    z3 = jax.block_until_ready(z3)
    assert jnp.allclose(z3, bias3 + jnp.exp(logs3) * x3, atol=1e-5, rtol=1e-5)

    print("KERNEL_OK")
</pallas_src>

<mosaic_0001>
module attributes {stable_mosaic.version = 11 : i64} {
  func.func @_fwd_mask_kernel(%arg0: i32, %arg1: i32, %arg2: memref<1x4x128xf32, #tpu.memory_space<vmem>>, %arg3: memref<1x1x128xf32, #tpu.memory_space<vmem>>, %arg4: memref<1x4x1xf32, #tpu.memory_space<vmem>>, %arg5: memref<1x4x1xf32, #tpu.memory_space<vmem>>, %arg6: memref<1x4x128xf32, #tpu.memory_space<vmem>>) attributes {dimension_semantics = [#tpu.dimension_semantics<parallel>, #tpu.dimension_semantics<parallel>], iteration_bounds = array<i64: 2, 1>, scalar_prefetch = 0 : i64, scratch_operands = 0 : i64, tpu.core_type = #tpu.core_type<tc>, window_params = [{transform_indices = @transform_0, window_bounds = array<i64: 1, 4, 128>}, {transform_indices = @transform_1, window_bounds = array<i64: 1, 1, 128>}, {pipeline_mode = #tpu.pipeline_mode<synchronous>, transform_indices = @transform_2, window_bounds = array<i64: 1, 4, 1>}, {pipeline_mode = #tpu.pipeline_mode<synchronous>, transform_indices = @transform_3, window_bounds = array<i64: 1, 4, 1>}, {transform_indices = @transform_4, window_bounds = array<i64: 1, 4, 128>}]} {
    %c0 = arith.constant 0 : index
    %c0_0 = arith.constant 0 : index
    %c0_1 = arith.constant 0 : index
    %0 = vector.load %arg2[%c0, %c0_0, %c0_1] : memref<1x4x128xf32, #tpu.memory_space<vmem>>, vector<1x4x128xf32>
    %c0_2 = arith.constant 0 : index
    %c0_3 = arith.constant 0 : index
    %c0_4 = arith.constant 0 : index
    %1 = vector.load %arg3[%c0_2, %c0_3, %c0_4] : memref<1x1x128xf32, #tpu.memory_space<vmem>>, vector<1x1x128xf32>
    %c0_5 = arith.constant 0 : index
    %c0_6 = arith.constant 0 : index
    %c0_7 = arith.constant 0 : index
    %2 = vector.load %arg5[%c0_5, %c0_6, %c0_7] : memref<1x4x1xf32, #tpu.memory_space<vmem>>, vector<1x4x1xf32>
    %c0_8 = arith.constant 0 : index
    %c0_9 = arith.constant 0 : index
    %c0_10 = arith.constant 0 : index
    %3 = vector.load %arg4[%c0_8, %c0_9, %c0_10] : memref<1x4x1xf32, #tpu.memory_space<vmem>>, vector<1x4x1xf32>
    %4 = vector.broadcast %3 : vector<1x4x1xf32> to vector<1x4x128xf32>
    %5 = arith.mulf %4, %0 : vector<1x4x128xf32>
    %6 = vector.broadcast %2 : vector<1x4x1xf32> to vector<1x4x128xf32>
    %7 = arith.addf %6, %5 : vector<1x4x128xf32>
    %8 = vector.broadcast %1 : vector<1x1x128xf32> to vector<1x4x128xf32>
    %9 = arith.mulf %7, %8 : vector<1x4x128xf32>
    %c0_11 = arith.constant 0 : index
    %c0_12 = arith.constant 0 : index
    %c0_13 = arith.constant 0 : index
    %10 = vector.load %arg6[%c0_11, %c0_12, %c0_13] : memref<1x4x128xf32, #tpu.memory_space<vmem>>, vector<1x4x128xf32>
    tpu.vector_store %arg6[%c0_11, %c0_12, %c0_13], %9 {strides = array<i32>} : memref<1x4x128xf32, #tpu.memory_space<vmem>>, vector<1x4x128xf32>,
    return
  }
  func.func @transform_0(%arg0: i32, %arg1: i32) -> (i32, i32, i32) {
    %c0_i32 = arith.constant 0 : i32
    %c0_i32_0 = arith.constant 0 : i32
    return %arg0, %c0_i32, %arg1 : i32, i32, i32
  }
  func.func @transform_1(%arg0: i32, %arg1: i32) -> (i32, i32, i32) {
    %c0_i32 = arith.constant 0 : i32
    %c0_i32_0 = arith.constant 0 : i32
    return %arg0, %c0_i32, %arg1 : i32, i32, i32
  }
  func.func @transform_2(%arg0: i32, %arg1: i32) -> (i32, i32, i32) {
    %c0_i32 = arith.constant 0 : i32
    %c0_i32_0 = arith.constant 0 : i32
    %c0_i32_1 = arith.constant 0 : i32
    %c0_i32_2 = arith.constant 0 : i32
    return %c0_i32, %c0_i32_0, %c0_i32_1 : i32, i32, i32
  }
  func.func @transform_3(%arg0: i32, %arg1: i32) -> (i32, i32, i32) {
    %c0_i32 = arith.constant 0 : i32
    %c0_i32_0 = arith.constant 0 : i32
    %c0_i32_1 = arith.constant 0 : i32
    %c0_i32_2 = arith.constant 0 : i32
    return %c0_i32, %c0_i32_0, %c0_i32_1 : i32, i32, i32
  }
  func.func @transform_4(%arg0: i32, %arg1: i32) -> (i32, i32, i32) {
    %c0_i32 = arith.constant 0 : i32
    %c0_i32_0 = arith.constant 0 : i32
    return %arg0, %c0_i32, %arg1 : i32, i32, i32
  }
}

</mosaic_0001>

<llo_original>
// kernel: tpu_custom_call.1
$region0: #{tpu_custom_call.1}
  #allocation0 [shape = 'u32[]', space=smem, size = 0x4, offset = 0x4, fixed_abs, tag = 'smem constant byte address 0x4 - core index']
  #allocation1 [shape = 'u32[144,128]{1,0:T(1,128)}', space=vmem, size = 0x12000, scoped, tag = 'internal scratch']
  %s0 = inlined_call_operand.vmem [shape: f32[2,4,16], index: 0, kind: input, shape index: {}]
  %s1 = inlined_call_operand.vmem [shape: f32[2,1,16], index: 1, kind: input, shape index: {}]
  %s2 = inlined_call_operand.vmem [shape: f32[1,4,1], index: 2, kind: input, shape index: {}]
  %s3 = inlined_call_operand.vmem [shape: f32[1,4,1], index: 3, kind: input, shape index: {}]
  %s4 = inlined_call_operand.hbm [shape: f32[2,4,16], index: 4, kind: output, shape index: {}]
  %s5 = sld [smem:[#allocation0]]
  $region49: #{tpu_custom_call.1} parent=0
    _
  %s7 = ssub.s32 1, %s5
  %s8 = scalar_select 0, %s7, %s5
  $region1: #{tpu_custom_call.1} parent=0
    #allocation2 [shape = 'u8[4096]{0}', space=vmem, size = 0x1000, scoped, tag = 'output window, operand 0']
    #allocation3 [shape = 's32[2]{0}', space=sflag, size = 0x8, scoped, tag = 'scoped memory for tpu_custom_call.1']
    %9 = vsyncpa [#allocation3], 0
    %s10 = scalar_lea.sflag [#allocation3], 1
    %11 = vsyncpa %s10, 0
    loop: start=0, step=1, limit=4
    $region2: #{tpu_custom_call.1} parent=1 // loop_pre_header
      _
    $region3: #{tpu_custom_call.1} parent=1 // loop_header
      %s13 = sphi 0, %s17
      %p14 = scmp.ge.s32.totalorder %s13, 4
      %s20 = sphi 0, %s32
      %s21 = sphi 0, %s28
      %s22 = sphi 0, %s20
      %s23 = sphi 0, %s21
      %s24 = sphi 0, %s22
      %s25 = sphi 0, %s23
      %s37 = sphi 0, %s39
      %s40 = sphi 0, %s37
      %s41 = sphi 0, %s40
      %s57 = sphi 0, %s41
      %s65 = sphi 0, %s67
      %s68 = sphi 0, %s65
      %s69 = sphi 0, %s68
      %s85 = sphi 0, %s69
      %s89 = sphi 0, %s89
      %s91 = sphi 0, %s89
      %s92 = sphi 0, %s91
      %s106 = sphi 0, %s92
      %s110 = sphi 0, %s110
      %s112 = sphi 0, %s110
      %s113 = sphi 0, %s112
      %s127 = sphi 0, %s113
      %s135 = sphi 0, %s137
      %s138 = sphi 0, %s135
      %s139 = sphi 0, %s138
      %s155 = sphi 0, %s139
    $region4: #{tpu_custom_call.1} parent=1 // loop_header_branch
      %16 = sbr.rel (%p14) target = $region8
    $region5: #{tpu_custom_call.1} parent=1 // loop_body
      %s18 = ssub.s32 %s13, 1
      %s19 = ssub.s32 %s13, 2
      %s26 = sadd.s32 1, %s21
      %p27 = scmp.ge.s32.totalorder %s26, 1
      %s28 = scalar_select %p27, 0, %s26
      %s29 = sadd.s32 1, %s20
      %s30 = scalar_select %p27, %s29, %s20
      %p31 = scmp.ge.s32.totalorder %s30, 2
      %s32 = scalar_select %p31, 0, %s30
      %s33 = ssub.s32 %s20, %s32
      %s34 = ssub.s32 %s21, %s28
      %s35 = sor.u32 %s33, %s34
      %p36 = scmp.eq.s32.totalorder %s35, 0
      %s38 = sadd.s32 %s37, 1
      %s39 = scalar_select %p36, %s37, %s38
      %p42 = pneg %p36
      %p43 = scmp.eq.s32.totalorder %s13, 1
      %p44 = por %p42, %p43
      %p45 = scmp.ne.s32.totalorder %s37, %s40
      %p46 = scmp.eq.s32.totalorder %s13, 0
      %p47 = por %p45, %p46
      %p48 = scmp.ne.s32.totalorder %s37, %s40
      %p49 = scmp.eq.s32.totalorder %s18, 1
      %p50 = por %p48, %p49
      %p51 = scmp.ne.s32.totalorder %s40, %s41
      %p52 = scmp.eq.s32.totalorder %s18, 0
      %p53 = por %p51, %p52
      %p54 = scmp.ne.s32.totalorder %s40, %s41
      %p55 = scmp.eq.s32.totalorder %s19, 1
      %p56 = por %p54, %p55
      %p58 = scmp.ne.s32.totalorder %s41, %s57
      %p59 = scmp.eq.s32.totalorder %s19, 0
      %p60 = por %p58, %p59
      %s61 = ssub.s32 %s20, %s32
      %s62 = ssub.s32 %s21, %s28
      %s63 = sor.u32 %s61, %s62
      %p64 = scmp.eq.s32.totalorder %s63, 0
      %s66 = sadd.s32 %s65, 1
      %s67 = scalar_select %p64, %s65, %s66
      %p70 = pneg %p64
      %p71 = scmp.eq.s32.totalorder %s13, 1
      %p72 = por %p70, %p71
      %p73 = scmp.ne.s32.totalorder %s65, %s68
      %p74 = scmp.eq.s32.totalorder %s13, 0
      %p75 = por %p73, %p74
      %p76 = scmp.ne.s32.totalorder %s65, %s68
      %p77 = scmp.eq.s32.totalorder %s18, 1
      %p78 = por %p76, %p77
      %p79 = scmp.ne.s32.totalorder %s68, %s69
      %p80 = scmp.eq.s32.totalorder %s18, 0
      %p81 = por %p79, %p80
      %p82 = scmp.ne.s32.totalorder %s68, %s69
      %p83 = scmp.eq.s32.totalorder %s19, 1
      %p84 = por %p82, %p83
      %p86 = scmp.ne.s32.totalorder %s69, %s85
      %p87 = scmp.eq.s32.totalorder %s19, 0
      %p88 = por %p86, %p87
      %s90 = sadd.s32 %s89, 1
      %p93 = scmp.eq.s32.totalorder %s13, 1
      %p94 = scmp.ne.s32.totalorder %s89, %s91
      %p95 = scmp.eq.s32.totalorder %s13, 0
      %p96 = por %p94, %p95
      %p97 = scmp.ne.s32.totalorder %s89, %s91
      %p98 = scmp.eq.s32.totalorder %s18, 1
      %p99 = por %p97, %p98
      %p100 = scmp.ne.s32.totalorder %s91, %s92
      %p101 = scmp.eq.s32.totalorder %s18, 0
      %p102 = por %p100, %p101
      %p103 = scmp.ne.s32.totalorder %s91, %s92
      %p104 = scmp.eq.s32.totalorder %s19, 1
      %p105 = por %p103, %p104
      %p107 = scmp.ne.s32.totalorder %s92, %s106
      %p108 = scmp.eq.s32.totalorder %s19, 0
      %p109 = por %p107, %p108
      %s111 = sadd.s32 %s110, 1
      %p114 = scmp.eq.s32.totalorder %s13, 1
      %p115 = scmp.ne.s32.totalorder %s110, %s112
      %p116 = scmp.eq.s32.totalorder %s13, 0
      %p117 = por %p115, %p116
      %p118 = scmp.ne.s32.totalorder %s110, %s112
      %p119 = scmp.eq.s32.totalorder %s18, 1
      %p120 = por %p118, %p119
      %p121 = scmp.ne.s32.totalorder %s112, %s113
      %p122 = scmp.eq.s32.totalorder %s18, 0
      %p123 = por %p121, %p122
      %p124 = scmp.ne.s32.totalorder %s112, %s113
      %p125 = scmp.eq.s32.totalorder %s19, 1
      %p126 = por %p124, %p125
      %p128 = scmp.ne.s32.totalorder %s113, %s127
      %p129 = scmp.eq.s32.totalorder %s19, 0
      %p130 = por %p128, %p129
      %s131 = ssub.s32 %s20, %s32
      %s132 = ssub.s32 %s21, %s28
      %s133 = sor.u32 %s131, %s132
      %p134 = scmp.eq.s32.totalorder %s133, 0
      %s136 = sadd.s32 %s135, 1
      %s137 = scalar_select %p134, %s135, %s136
      %p140 = pneg %p134
      %p141 = scmp.eq.s32.totalorder %s13, 1
      %p142 = por %p140, %p141
      %p143 = scmp.ne.s32.totalorder %s135, %s138
      %p144 = scmp.eq.s32.totalorder %s13, 0
      %p145 = por %p143, %p144
      %p146 = scmp.ne.s32.totalorder %s135, %s138
      %p147 = scmp.eq.s32.totalorder %s18, 1
      %p148 = por %p146, %p147
      %p149 = scmp.ne.s32.totalorder %s138, %s139
      %p150 = scmp.eq.s32.totalorder %s18, 0
      %p151 = por %p149, %p150
      %p152 = scmp.ne.s32.totalorder %s138, %s139
      %p153 = scmp.eq.s32.totalorder %s19, 1
      %p154 = por %p152, %p153
      %p156 = scmp.ne.s32.totalorder %s139, %s155
      %p157 = scmp.eq.s32.totalorder %s19, 0
      %p158 = por %p156, %p157
      %p159 = scmp.le.s32.totalorder 1, %s13
      %p160 = scmp.lt.s32.totalorder %s13, 3
      %p161 = pnand %p159, %p160
      %p162 = pneg %p161
      // Predicated region
      $region9: #{tpu_custom_call.1} parent=5 // pred_check
        _
      $region10: #{tpu_custom_call.1} parent=5 // pred_check_branch
        %164 = sbr.rel (%p161) target = $region12
      $region11: #{tpu_custom_call.1} parent=5 // pred_region
        %s165 = ssub.s32 %s13, 1
        // Predicated region
        $region13: #{tpu_custom_call.1} parent=11 // pred_check
          %p166 = pneg %p102
        $region14: #{tpu_custom_call.1} parent=11 // pred_check_branch
          %168 = sbr.rel (%p166) target = $region16
        $region15: #{tpu_custom_call.1} parent=11 // pred_region
          _
        $region16: #{tpu_custom_call.1} parent=11 // pred_fallthru
          _
        // Predicated region
        $region17: #{tpu_custom_call.1} parent=11 // pred_check
          %p169 = pneg %p123
        $region18: #{tpu_custom_call.1} parent=11 // pred_check_branch
          %171 = sbr.rel (%p169) target = $region20
        $region19: #{tpu_custom_call.1} parent=11 // pred_region
          _
        $region20: #{tpu_custom_call.1} parent=11 // pred_fallthru
          _
      $region12: #{tpu_custom_call.1} parent=5 // pred_fallthru
        _
      %p172 = scmp.lt.s32.totalorder %s13, 2
      // Predicated region
      $region21: #{tpu_custom_call.1} parent=5 // pred_check
        %p173 = pneg %p172
      $region22: #{tpu_custom_call.1} parent=5 // pred_check_branch
        %175 = sbr.rel (%p173) target = $region24
      $region23: #{tpu_custom_call.1} parent=5 // pred_region
        // Predicated region
        $region25: #{tpu_custom_call.1} parent=23 // pred_check
          %p176 = pneg %p47
        $region26: #{tpu_custom_call.1} parent=23 // pred_check_branch
          %178 = sbr.rel (%p176) target = $region28
        $region27: #{tpu_custom_call.1} parent=23 // pred_region
          %p179 = scmp.lt.s32.totalorder %s20, 1
          %s180 = scalar_select %p179, %s20, 1
          %p181 = scmp.lt.s32.totalorder %s21, 0
          %s182 = scalar_select %p181, %s21, 0
          %s183 = sadd.s32 %s182, %s180
          %s184 = smul.addr %s183, 4
          %s185 = scalar_lea.vmem %s0, %s184
        $region28: #{tpu_custom_call.1} parent=23 // pred_fallthru
          _
        // Predicated region
        $region29: #{tpu_custom_call.1} parent=23 // pred_check
          %p186 = pneg %p75
        $region30: #{tpu_custom_call.1} parent=23 // pred_check_branch
          %188 = sbr.rel (%p186) target = $region32
        $region31: #{tpu_custom_call.1} parent=23 // pred_region
          %p189 = scmp.lt.s32.totalorder %s20, 1
          %s190 = scalar_select %p189, %s20, 1
          %p191 = scmp.lt.s32.totalorder %s21, 0
          %s192 = scalar_select %p191, %s21, 0
          %s193 = sadd.s32 %s192, %s190
          %s194 = scalar_lea.vmem %s1, %s193
        $region32: #{tpu_custom_call.1} parent=23 // pred_fallthru
          _
      $region24: #{tpu_custom_call.1} parent=5 // pred_fallthru
        _
      %p195 = scmp.le.s32.totalorder 1, %s13
      %p196 = scmp.lt.s32.totalorder %s13, 3
      %p197 = pnand %p195, %p196
      %p198 = pneg %p197
      // Predicated region
      $region33: #{tpu_custom_call.1} parent=5 // pred_check
        _
      $region34: #{tpu_custom_call.1} parent=5 // pred_check_branch
        %200 = sbr.rel (%p197) target = $region36
      $region35: #{tpu_custom_call.1} parent=5 // pred_region
        %s201 = ssub.s32 %s13, 1
        %p202 = scmp.lt.s32.totalorder %s22, 1
        %s203 = scalar_select %p202, %s22, 1
        %p204 = scmp.lt.s32.totalorder %s23, 0
        %s205 = scalar_select %p204, %s23, 0
        %s206 = sadd.s32 %s205, %s203
        %s207 = smul.addr %s206, 4
        %s208 = scalar_lea.vmem %s0, %s207
        %p209 = pneg %p53
        %p210 = pneg %p50
        %p211 = scmp.lt.s32.totalorder %s22, 1
        %s212 = scalar_select %p211, %s22, 1
        %p213 = scmp.lt.s32.totalorder %s23, 0
        %s214 = scalar_select %p213, %s23, 0
        %s215 = sadd.s32 %s214, %s212
        %s216 = scalar_lea.vmem %s1, %s215
        %p217 = pneg %p81
        %p218 = pneg %p78
        %p219 = pneg %p102
        %p220 = pneg %p99
        %p221 = pneg %p123
        %p222 = pneg %p120
        %p223 = pneg %p151
        %p224 = pneg %p148
        %s225 = sand.u32 %s138, 1
        %s226 = scalar_lea.sflag [#allocation3], %s225
        %s227 = sand.u32 %s138, 1
        %s228 = smul.addr %s227, 4
        %s229 = scalar_lea.vmem [#allocation2], %s228
        %p230 = scmp.lt.s32.totalorder %s22, 1
        %s231 = scalar_select %p230, %s22, 1
        %p232 = scmp.lt.s32.totalorder %s23, 0
        %s233 = scalar_select %p232, %s23, 0
        %s234 = sadd.s32 %s233, %s231
        %s235 = smul.addr %s234, 4
        %s236 = scalar_lea.vmem %s0, %s235
        %p237 = scmp.lt.s32.totalorder %s22, 1
        %s238 = scalar_select %p237, %s22, 1
        %p239 = scmp.lt.s32.totalorder %s23, 0
        %s240 = scalar_select %p239, %s23, 0
        %s241 = sadd.s32 %s240, %s238
        %s242 = scalar_lea.vmem %s1, %s241
        %v243 = vld [vmem:[%s236] sm:$0xf]
        %v244 = vld [vmem:[%s242] sm:$0x1]
        %v245 = vld [vmem:[%s3] sm:$0xf]
        %v246 = vld [vmem:[%s2] sm:$0xf]
        %248 = vset.pattern.permute.xlu0 0
        %249 = vperm.xlu0 %248, %v246
        %v250 = vpop.permute.xlu0 %249
        %v252 = vmul.f32 %v250, %v243
        %254 = vset.pattern.permute.xlu0 0
        %255 = vperm.xlu0 %254, %v245
        %v256 = vpop.permute.xlu0 %255
        %v258 = vadd.f32 %v256, %v252
        %v260 = vlaneseq
        %v261 = vshrl.u32 %v260, 7
        %v262 = vsub.s32 0, %v261
        %v263 = vrot.slane %v244, %v262
        %v265 = vmul.f32 %v258, %v263
        %266 = vst [vmem:[%s229] sm:$0xf] %v265
        %s267 = sand.u32 %s138, 1
        %s268 = scalar_lea.sflag [#allocation3], %s267
        %s269 = sand.u32 %s138, 1
        %s270 = smul.addr %s269, 4
        %s271 = scalar_lea.vmem [#allocation2], %s270
        // Predicated region
        $region37: #{tpu_custom_call.1} parent=35 // pred_check
          %p272 = pneg %p148
        $region38: #{tpu_custom_call.1} parent=35 // pred_check_branch
          %274 = sbr.rel (%p272) target = $region40
        $region39: #{tpu_custom_call.1} parent=35 // pred_region
          %s276 = ssub.s32 64, 64
          %277 = vsyncadd %s268, %s276
          %s278 = sadd.s32 %s23, %s22
          %s279 = smul.addr %s278, 64
          %s280 = scalar_lea.hbm %s4, %s279
          %s282 = sshll.u32 %s271, 4
          %s283 = int_to_ptr.vmem [resolvable:$true] %s282
          %285 = dma.vmem_to_hbm [thread:$0]  %s283, 64, %s280, %s268
        $region40: #{tpu_custom_call.1} parent=35 // pred_fallthru
          _
      $region36: #{tpu_custom_call.1} parent=5 // pred_fallthru
        _
      %p286 = scmp.le.s32.totalorder 2, %s13
      // Predicated region
      $region41: #{tpu_custom_call.1} parent=5 // pred_check
        %p287 = pneg %p286
      $region42: #{tpu_custom_call.1} parent=5 // pred_check_branch
        %289 = sbr.rel (%p287) target = $region44
      $region43: #{tpu_custom_call.1} parent=5 // pred_region
        %s290 = ssub.s32 %s13, 2
        // Predicated region
        $region45: #{tpu_custom_call.1} parent=43 // pred_check
          %p291 = pneg %p154
        $region46: #{tpu_custom_call.1} parent=43 // pred_check_branch
          %293 = sbr.rel (%p291) target = $region48
        $region47: #{tpu_custom_call.1} parent=43 // pred_region
          %s294 = sand.u32 %s139, 1
          %s295 = scalar_lea.sflag [#allocation3], %s294
          %s296 = sand.u32 %s139, 1
          %s297 = smul.addr %s296, 4
          %s298 = scalar_lea.vmem [#allocation2], %s297
          %299 = dma.done %s295, 64
        $region48: #{tpu_custom_call.1} parent=43 // pred_fallthru
          _
      $region44: #{tpu_custom_call.1} parent=5 // pred_fallthru
        _
    $region6: #{tpu_custom_call.1} parent=1 // loop_footer
      %s17 = sadd.s32 1, %s13
    $region7: #{tpu_custom_call.1} parent=1 // loop_footer_branch
      %12 = sbr.rel target = $region3
    $region8: #{tpu_custom_call.1} parent=1 // loop_exit
      _
    %300 = vsyncpa [#allocation3], 1
    %s301 = scalar_lea.sflag [#allocation3], 1
    %302 = vsyncpa %s301, 1

</llo_original>
